<compile_context>
chip_gen: v5e
topology: v5e:2x2
jax: 0.10.0
libtpu: 0.0.40
codegen_flags: <defaults>
</compile_context>

<pallas_src>
import jax
import jax.numpy as jnp
from jax import lax
from jax.experimental import pallas as pl
from jax.experimental.pallas import tpu as pltpu


DEFAULT_TM = 512                   # patch-row tile (review: sweep 512-1024)
VMEM_BUDGET_BYTES = 48 << 20       # v7x-safe working-set budget (64 MiB phys)
VMEM_LIMIT_CAP = 56 << 20          # never request (nearly) all of v7x VMEM
WEIGHT_RESIDENT_LIMIT = 16 << 20   # above this, tile E instead of residing
WEIGHT_TILE_TARGET = 8 << 20       # per-tile weight target when tiling E


def _round_up(a, b):
    return (a + b - 1) // b * b


def _patch_embed_kernel(x_ref, w_ref, b_ref, o_ref):
    # x_ref: (TM, K) patch rows; w_ref: (K, TE) VMEM-resident weight (tile);
    # b_ref: (1, TE) f32 bias; o_ref: (TM, TE).  f32 MXU accumulation, bias
    # added in f32, single cast to the output dtype.
    acc = jnp.dot(x_ref[...], w_ref[...], preferred_element_type=jnp.float32)
    o_ref[...] = (acc + b_ref[...]).astype(o_ref.dtype)


def _pick_tile_m(M, tm_target, row_bytes, fixed_bytes):
    """Pick TM: as large as the VMEM budget allows, and preferably a divisor
    of M so no extra jnp.pad HBM pass over the activations is needed."""
    tm = min(_round_up(tm_target, 8), _round_up(M, 8))
    # Shrink until the double-buffered streaming tiles + resident weight fit.
    while tm > 8 and 2 * tm * row_bytes + fixed_bytes > VMEM_BUDGET_BYTES:
        tm = max(_round_up(tm // 2, 8), 8)
    # Prefer a nearby multiple-of-8 divisor of M (skips the M pad pass).
    if M % tm != 0:
        for cand in range(tm, max(tm // 2, 8) - 1, -8):
            if cand > 0 and M % cand == 0:
                return cand
    return tm


def patch_embed(x, weight, bias, patch_size, *,
                compute_dtype=jnp.bfloat16, out_dtype=None,
                channels_last_input=False, output_format="NCHW",
                tm=DEFAULT_TM):
    """PatchEmbed forward == Conv2d(in_chans, embed_dim, kernel=stride=patch).

    x:      (B, C, H, W) NCHW (module default) or (B, H, W, C) if
            channels_last_input=True (cheaper glue for channels-last producers).
    weight: (E, C, ph, pw) OIHW.   bias: (E,).
    compute_dtype: MXU input dtype (default bf16; accumulation is always f32).
                   Pass None to keep the input dtype (bit-tight f32 path).
    out_dtype: output dtype (default x.dtype; pass bf16 to halve writeback).
    output_format: "NCHW" (module semantics), "NHWC", or "BNE" = (B, Ho*Wo, E).
    """
    ph, pw = patch_size
    E = weight.shape[0]
    if channels_last_input:
        B, H, W, C = x.shape
    else:
        B, C, H, W = x.shape
    assert H % ph == 0 and W % pw == 0, "image size must be divisible by patch"
    Ho, Wo = H // ph, W // pw
    M = B * Ho * Wo
    K = C * ph * pw
    if out_dtype is None:
        out_dtype = x.dtype
    cdt = x.dtype if compute_dtype is None else compute_dtype

    # ---- glue: patch rows (M, K) + matching weight flattening --------------
    # NCHW input  -> K ordered (C, ph, pw): single 6-D transpose, natural OIHW
    #                weight flatten.
    # NHWC input  -> K ordered (ph, pw, C): the *small* weight is permuted
    #                instead and the activation shuffle stays local per row
    #                band (review item: permute the weight, not the big
    #                activation, when the producer is channels-last).
    if channels_last_input:
        xp = x.reshape(B, Ho, ph, Wo, pw, C).transpose(0, 1, 3, 2, 4, 5)
        wm = weight.transpose(2, 3, 1, 0).reshape(K, E)
    else:
        xp = x.reshape(B, C, Ho, ph, Wo, pw).transpose(0, 2, 4, 1, 3, 5)
        wm = weight.reshape(E, K).T
    xp = xp.reshape(M, K).astype(cdt)        # cast fuses into the transpose
    wm = wm.astype(cdt)
    bm = bias.reshape(1, E).astype(jnp.float32)

    in_itm = jnp.dtype(cdt).itemsize
    w_itm = in_itm
    out_itm = jnp.dtype(out_dtype).itemsize

    # ---- E tiling (only for very large embed dims; keeps v7x VMEM sane) ----
    TE = E
    if K * E * w_itm > WEIGHT_RESIDENT_LIMIT and E % 128 == 0:
        while (K * TE * w_itm > WEIGHT_TILE_TARGET and TE % 2 == 0
               and (TE // 2) % 128 == 0 and (TE // 2) >= 256):
            TE //= 2
    grid_e = E // TE
    # Whole-array resident weight is single-buffered; streamed tiles are
    # double-buffered by the pipeline.
    w_resident_bytes = K * TE * w_itm * (1 if grid_e == 1 else 2)

    # ---- M tiling -----------------------------------------------------------
    row_bytes = K * in_itm + TE * out_itm        # per patch row, per buffer
    TM = _pick_tile_m(M, tm, row_bytes, w_resident_bytes)
    M_pad = _round_up(M, TM)
    if M_pad != M:
        xp = jnp.pad(xp, ((0, M_pad - M), (0, 0)))
    grid_m = M_pad // TM

    vmem_bytes = 2 * TM * row_bytes + w_resident_bytes + E * 4 + (2 << 20)
    vmem_bytes = int(min(max(vmem_bytes, 8 << 20), VMEM_LIMIT_CAP))

    if grid_e == 1:
        # Constant across the grid -> keep a single VMEM-resident copy
        # (no double-buffering of the weight/bias).
        w_spec = pl.BlockSpec(memory_space=pltpu.MemorySpace.VMEM)
        b_spec = pl.BlockSpec(memory_space=pltpu.MemorySpace.VMEM)
    else:
        w_spec = pl.BlockSpec((K, TE), lambda i, j: (0, j))
        b_spec = pl.BlockSpec((1, TE), lambda i, j: (0, j))

    cost = pl.CostEstimate(
        flops=2 * M_pad * K * E,
        transcendentals=0,
        bytes_accessed=(M_pad * K * in_itm + K * E * w_itm + E * 4
                        + M_pad * E * out_itm))

    out = pl.pallas_call(
        _patch_embed_kernel,
        out_shape=jax.ShapeDtypeStruct((M_pad, E), out_dtype),
        grid=(grid_m, grid_e),
        in_specs=[
            pl.BlockSpec((TM, K), lambda i, j: (i, 0)),   # streamed patch rows
            w_spec,
            b_spec,
        ],
        out_specs=pl.BlockSpec((TM, TE), lambda i, j: (i, j)),
        compiler_params=pltpu.CompilerParams(
            dimension_semantics=("parallel", "parallel"),
            vmem_limit_bytes=vmem_bytes),
        cost_estimate=cost,
    )(xp, wm, bm)

    if M_pad != M:
        out = out[:M]
    out = out.reshape(B, Ho, Wo, E)
    if output_format == "NCHW":      # module semantics (Conv2d output layout)
        return out.transpose(0, 3, 1, 2)
    if output_format == "NHWC":
        return out
    if output_format == "BNE":       # transformer-friendly, skips a transpose
        return out.reshape(B, Ho * Wo, E)
    raise ValueError(f"unknown output_format: {output_format}")


if __name__ == "__main__":
    # Small config consistent with the module: img_size=16, patch_size=4,
    # in_chans=4, embed_dim=32, norm_layer=None.
    B, C, H, W = 2, 4, 16, 16
    ph = pw = 4
    E = 32

    key = jax.random.PRNGKey(0)
    kx, kw, kb = jax.random.split(key, 3)
    x = jax.random.normal(kx, (B, C, H, W), dtype=jnp.float32)
    weight = (jax.random.normal(kw, (E, C, ph, pw), dtype=jnp.float32)
              * (1.0 / (C * ph * pw) ** 0.5))
    bias = jax.random.normal(kb, (E,), dtype=jnp.float32) * 0.01

    # Reference: strided conv == nn.Conv2d(kernel=stride=patch_size).
    ref = lax.conv_general_dilated(
        x, weight, window_strides=(ph, pw), padding="VALID",
        dimension_numbers=("NCHW", "OIHW", "NCHW"),
    ) + bias.reshape(1, E, 1, 1)

    Ho, Wo = H // ph, W // pw

    # 1) Default path: bf16 MXU inputs, f32 accumulation, NCHW in/out.
    out_bf16 = jax.block_until_ready(patch_embed(x, weight, bias, (ph, pw)))
    assert out_bf16.shape == (B, E, Ho, Wo)
    assert jnp.allclose(out_bf16, ref, atol=5e-2, rtol=5e-2)

    # 2) f32 compute path (bit-tight check against the Conv2d reference).
    out_f32 = jax.block_until_ready(
        patch_embed(x, weight, bias, (ph, pw), compute_dtype=None))
    assert out_f32.shape == (B, E, Ho, Wo)
    assert jnp.allclose(out_f32, ref, atol=1e-4, rtol=1e-4)

    # 3) Channels-last input path (small weight permuted instead of the big
    #    activation transpose).
    x_nhwc = x.transpose(0, 2, 3, 1)
    out_cl = jax.block_until_ready(
        patch_embed(x_nhwc, weight, bias, (ph, pw),
                    channels_last_input=True, compute_dtype=None))
    assert out_cl.shape == (B, E, Ho, Wo)
    assert jnp.allclose(out_cl, ref, atol=1e-4, rtol=1e-4)

    print("KERNEL_OK")
</pallas_src>

<mosaic_0001>
module attributes {stable_mosaic.version = 11 : i64} {
  func.func @_patch_embed_kernel(%arg0: i32, %arg1: i32, %arg2: memref<32x64xbf16, #tpu.memory_space<vmem>>, %arg3: memref<64x32xbf16, #tpu.memory_space<vmem>>, %arg4: memref<1x32xf32, #tpu.memory_space<vmem>>, %arg5: memref<32x32xf32, #tpu.memory_space<vmem>>) attributes {dimension_semantics = [#tpu.dimension_semantics<parallel>, #tpu.dimension_semantics<parallel>], iteration_bounds = array<i64: 1, 1>, scalar_prefetch = 0 : i64, scratch_operands = 0 : i64, tpu.core_type = #tpu.core_type<tc>, window_params = [{transform_indices = @transform_0, window_bounds = array<i64: 32, 64>}, {pipeline_mode = #tpu.pipeline_mode<synchronous>, transform_indices = @transform_1, window_bounds = array<i64: 64, 32>}, {pipeline_mode = #tpu.pipeline_mode<synchronous>, transform_indices = @transform_2, window_bounds = array<i64: 1, 32>}, {transform_indices = @transform_3, window_bounds = array<i64: 32, 32>}]} {
    %c0 = arith.constant 0 : index
    %c0_0 = arith.constant 0 : index
    %0 = vector.load %arg2[%c0, %c0_0] : memref<32x64xbf16, #tpu.memory_space<vmem>>, vector<32x64xbf16>
    %c0_1 = arith.constant 0 : index
    %c0_2 = arith.constant 0 : index
    %1 = vector.load %arg3[%c0_1, %c0_2] : memref<64x32xbf16, #tpu.memory_space<vmem>>, vector<64x32xbf16>
    %cst = arith.constant dense<0.000000e+00> : vector<32x32xf32>
    %2 = tpu.matmul %0, %1, %cst {dimension_numbers = #tpu.dot_dimension_numbers<[1], [0], [0], [1], [0, 0, 1, 1], [], []>} : vector<32x64xbf16>, vector<64x32xbf16>, vector<32x32xf32> -> vector<32x32xf32>
    %c0_3 = arith.constant 0 : index
    %c0_4 = arith.constant 0 : index
    %3 = vector.load %arg4[%c0_3, %c0_4] : memref<1x32xf32, #tpu.memory_space<vmem>>, vector<1x32xf32>
    %4 = vector.broadcast %3 : vector<1x32xf32> to vector<32x32xf32>
    %5 = arith.addf %2, %4 : vector<32x32xf32>
    %c0_5 = arith.constant 0 : index
    %c0_6 = arith.constant 0 : index
    %6 = vector.load %arg5[%c0_5, %c0_6] : memref<32x32xf32, #tpu.memory_space<vmem>>, vector<32x32xf32>
    tpu.vector_store %arg5[%c0_5, %c0_6], %5 {strides = array<i32>} : memref<32x32xf32, #tpu.memory_space<vmem>>, vector<32x32xf32>,
    return
  }
  func.func @transform_0(%arg0: i32, %arg1: i32) -> (i32, i32) {
    %c0_i32 = arith.constant 0 : i32
    %c0_i32_0 = arith.constant 0 : i32
    return %arg0, %c0_i32 : i32, i32
  }
  func.func @transform_1(%arg0: i32, %arg1: i32) -> (i32, i32) {
    %c0_i32 = arith.constant 0 : i32
    %c0_i32_0 = arith.constant 0 : i32
    %c0_i32_1 = arith.constant 0 : i32
    return %c0_i32, %c0_i32_0 : i32, i32
  }
  func.func @transform_2(%arg0: i32, %arg1: i32) -> (i32, i32) {
    %c0_i32 = arith.constant 0 : i32
    %c0_i32_0 = arith.constant 0 : i32
    %c0_i32_1 = arith.constant 0 : i32
    return %c0_i32, %c0_i32_0 : i32, i32
  }
  func.func @transform_3(%arg0: i32, %arg1: i32) -> (i32, i32) {
    %c0_i32 = arith.constant 0 : i32
    return %arg0, %arg1 : i32, i32
  }
}

</mosaic_0001>

<llo_original>
// kernel: tpu_custom_call.1
$region0: #{tpu_custom_call.1}
  #allocation0 [shape = 'u32[]', space=smem, size = 0x4, offset = 0x4, fixed_abs, tag = 'smem constant byte address 0x4 - core index']
  #allocation1 [shape = 'u32[72,128]{1,0:T(1,128)}', space=vmem, size = 0x9000, scoped, tag = 'internal scratch']
  %s0 = inlined_call_operand.vmem [shape: bf16[32,64], index: 0, kind: input, shape index: {}]
  %s1 = inlined_call_operand.vmem [shape: bf16[64,32], index: 1, kind: input, shape index: {}]
  %s2 = inlined_call_operand.vmem [shape: f32[1,32], index: 2, kind: input, shape index: {}]
  %s3 = inlined_call_operand.hbm [shape: f32[32,32], index: 3, kind: output, shape index: {}]
  %s4 = sld [smem:[#allocation0]]
  $region22: #{tpu_custom_call.1} parent=0
    _
  %s6 = ssub.s32 1, %s4
  %s7 = scalar_select 0, %s6, %s4
  $region1: #{tpu_custom_call.1} parent=0
    #allocation2 [shape = 'u8[16384]{0}', space=vmem, size = 0x4000, scoped, tag = 'output window, operand 0, single buffered']
    #allocation3 [shape = 's32[1]{0}', space=sflag, size = 0x4, scoped, tag = 'scoped memory for tpu_custom_call.1']
    %8 = vsyncpa [#allocation3], 0
    // Predicated region
    $region2: #{tpu_custom_call.1} parent=1 // pred_check
      _
    $region3: #{tpu_custom_call.1} parent=1 // pred_check_branch
      %10 = sbr.rel (0) target = $region5
    $region4: #{tpu_custom_call.1} parent=1 // pred_region
      _
    $region5: #{tpu_custom_call.1} parent=1 // pred_fallthru
      _
    // Predicated region
    $region6: #{tpu_custom_call.1} parent=1 // pred_check
      _
    $region7: #{tpu_custom_call.1} parent=1 // pred_check_branch
      %12 = sbr.rel (0) target = $region9
    $region8: #{tpu_custom_call.1} parent=1 // pred_region
      _
    $region9: #{tpu_custom_call.1} parent=1 // pred_fallthru
      _
    // Predicated region
    $region10: #{tpu_custom_call.1} parent=1 // pred_check
      _
    $region11: #{tpu_custom_call.1} parent=1 // pred_check_branch
      %14 = sbr.rel (0) target = $region13
    $region12: #{tpu_custom_call.1} parent=1 // pred_region
      _
    $region13: #{tpu_custom_call.1} parent=1 // pred_fallthru
      _
    %v16 = vld [vmem:[%s0] sm:$0xf]
    %v17 = vld [vmem:[%s0 + $0x4] sm:$0xf]
    %v18 = vld [vmem:[%s0 + $0x8] sm:$0xf]
    %v19 = vld [vmem:[%s0 + $0xc] sm:$0xf]
    %v20 = vld [vmem:[%s1] sm:$0xf]
    %v21 = vld [vmem:[%s1 + $0x4] sm:$0xf]
    %v22 = vld [vmem:[%s1 + $0x8] sm:$0xf]
    %v23 = vld [vmem:[%s1 + $0xc] sm:$0xf]
    %v24 = vld [vmem:[%s1 + $0x10] sm:$0xf]
    %v25 = vld [vmem:[%s1 + $0x14] sm:$0xf]
    %v26 = vld [vmem:[%s1 + $0x18] sm:$0xf]
    %v27 = vld [vmem:[%s1 + $0x1c] sm:$0xf]
    %v28 = vld [vmem:[%s2] sm:$0x1]
    %v30 = vperm.slane %v28, 0
    %v36 = vunpack.c.l.b16 %v16
    %v37 = vunpack.c.l.b16 %v17
    %v38 = vunpack.c.l.b16 %v18
    %v39 = vunpack.c.l.b16 %v19
    %v40 = vpack.c.b16 %v37, %v36
    %v41 = vpack.c.b16 %v39, %v38
    %v50 = vunpack.c.l.b16 %v20
    %v51 = vunpack.c.l.b16 %v21
    %v52 = vunpack.c.l.b16 %v22
    %v53 = vunpack.c.l.b16 %v23
    %v54 = vunpack.c.l.b16 %v24
    %v55 = vunpack.c.l.b16 %v25
    %v56 = vunpack.c.l.b16 %v26
    %v57 = vunpack.c.l.b16 %v27
    %v58 = vpack.c.b16 %v51, %v50
    %v59 = vpack.c.b16 %v53, %v52
    %v60 = vpack.c.b16 %v55, %v54
    %v61 = vpack.c.b16 %v57, %v56
    %vm66 = vcmask 523264
    %v68 = vsel %vm66, %v40, 0
    %v71 = vsel %vm66, %v41, 0
    %73 = vmatpush.bf16.msra.mxu0 0
    %74 = vmatpush.bf16.msra.mxu0 0
    %75 = vmatpush.bf16.msra.mxu0 0
    %76 = vmatpush.bf16.msra.mxu0 0
    %77 = vmatpush.bf16.msra.mxu0 %v61
    %78 = vmatpush.bf16.msra.mxu0 %v60
    %79 = vmatpush.bf16.msra.mxu0 %v59
    %80 = vmatpush.bf16.msra.mxu0 %v58
    %81 = vmatmul.bf16.gmra.mxu0 %v68
    %v82 = vpop.f32.mrf.mxu0
    %v83 = vadd.f32 %v30, %v82
    %v84 = vpop.f32.mrf.mxu0
    %v85 = vadd.f32 %v30, %v84
    %86 = vmatmul.bf16.gmra.mxu0 %v71
    %v87 = vpop.f32.mrf.mxu0
    %v88 = vadd.f32 %v30, %v87
    %v89 = vpop.f32.mrf.mxu0
    %v90 = vadd.f32 %v30, %v89
    %91 = vdwg.mxu0
    %vm92 = vcmask 261120
    %93 = vst.msk [vmem:[#allocation2] sm:$0xff] %vm92, %v83
    %94 = vst.msk [vmem:[#allocation2 + $0x8] sm:$0xff] %vm92, %v85
    %95 = vst.msk [vmem:[#allocation2 + $0x10] sm:$0xff] %vm92, %v88
    %96 = vst.msk [vmem:[#allocation2 + $0x18] sm:$0xff] %vm92, %v90
    // Predicated region
    $region14: #{tpu_custom_call.1} parent=1 // pred_check
      _
    $region15: #{tpu_custom_call.1} parent=1 // pred_check_branch
      %98 = sbr.rel (0) target = $region17
    $region16: #{tpu_custom_call.1} parent=1 // pred_region
      %100 = vsyncadd [#allocation3], 0
      %s101 = sshll.u32 [#allocation2], 4
      %s102 = int_to_ptr.vmem [resolvable:$true] %s101
      %s103 = sshll.u32 %s3, 4
      %s104 = int_to_ptr.hbm [resolvable:$true] %s103
      %109 = dma.vmem_to_hbm [thread:$0]  %s102, 512, %s104, [#allocation3], 128, 128, 8
    $region17: #{tpu_custom_call.1} parent=1 // pred_fallthru
      _
    // Predicated region
    $region18: #{tpu_custom_call.1} parent=1 // pred_check
      _
    $region19: #{tpu_custom_call.1} parent=1 // pred_check_branch
      %111 = sbr.rel (0) target = $region21
    $region20: #{tpu_custom_call.1} parent=1 // pred_region
      %113 = dma.done [#allocation3], 512
    $region21: #{tpu_custom_call.1} parent=1 // pred_fallthru
      _
    %114 = vsyncpa [#allocation3], 1

</llo_original>
